<compile_context>
chip_gen: v5e
topology: v5e:2x2
jax: 0.10.0
libtpu: 0.0.40
codegen_flags: <defaults>
</compile_context>

<pallas_src>
import functools

import jax
import jax.numpy as jnp
from jax.experimental import pallas as pl
from jax.experimental.pallas import tpu as pltpu

_EPS = 1e-5            # PyTorch BatchNorm2d default eps
_FOLD_CIN_MAX = 128    # fold all 9 taps into one matmul when Cin <= this


def _round_up(x, m):
    return ((x + m - 1) // m) * m


@functools.lru_cache(maxsize=None)
def _vmem_limit():
    """Generation-aware scoped-VMEM limit (leave headroom under physical VMEM)."""
    cap = 64 * 1024 * 1024           # conservative default (v7x physical VMEM)
    try:
        info = pltpu.get_tpu_info()
        cap = int(getattr(info, "vmem_capacity_bytes", cap) or cap)
    except Exception:
        pass
    # v5e/v6e (128 MiB) -> 96 MiB ; v7x (64 MiB) -> 48 MiB ; never below 32 MiB.
    return max(32 * 1024 * 1024, min((cap * 3) // 4, 96 * 1024 * 1024))


# ----------------------------------------------------------------------------
# 1x1 conv + folded BN + ReLU
# ----------------------------------------------------------------------------
def _conv1x1_kernel(x_ref, w_ref, scale_ref, bias_ref, mask_ref, o_ref):
    # x_ref: (1, Cin, LB) bf16   w_ref: (Cout, Cin) bf16
    # scale/bias: (Cout, 1) f32  mask: (1, LB) f32   o_ref: (1, Cout, LB)
    y = jnp.dot(w_ref[...], x_ref[0], preferred_element_type=jnp.float32)
    y = jnp.maximum(y * scale_ref[...] + bias_ref[...], 0.0)
    o_ref[0] = (y * mask_ref[...]).astype(o_ref.dtype)


def conv1x1_bn_relu(x, w, scale, bias, mask, *, lb):
    """1x1 conv (no bias) + folded BatchNorm(eval) + ReLU, tiled over batch & lanes."""
    n, cin, lpad = x.shape
    cout = w.shape[0]
    grid = (n, lpad // lb)           # lb divides lpad by construction
    return pl.pallas_call(
        _conv1x1_kernel,
        out_shape=jax.ShapeDtypeStruct((n, cout, lpad), jnp.bfloat16),
        grid=grid,
        in_specs=[
            pl.BlockSpec((1, cin, lb), lambda i, l: (i, 0, l)),
            pl.BlockSpec((cout, cin), lambda i, l: (0, 0)),
            pl.BlockSpec((cout, 1), lambda i, l: (0, 0)),
            pl.BlockSpec((cout, 1), lambda i, l: (0, 0)),
            pl.BlockSpec((1, lb), lambda i, l: (0, l)),
        ],
        out_specs=pl.BlockSpec((1, cout, lb), lambda i, l: (i, 0, l)),
        compiler_params=pltpu.CompilerParams(
            dimension_semantics=("parallel", "parallel"),
            vmem_limit_bytes=_vmem_limit()),
    )(x, w, scale.reshape(cout, 1).astype(jnp.float32),
      bias.reshape(cout, 1).astype(jnp.float32), mask)


# ----------------------------------------------------------------------------
# 3x3 conv (pad=1) + folded BN affine (+ optional ReLU), lane-tiled with halo
# ----------------------------------------------------------------------------
def _make_conv3x3_kernel(*, n_in, modes, wpad, lb, apply_relu):
    """refs: for each input slab s: xprev_s, xcur_s, xnext_s  (1, Cin_s, LB) bf16;
             then w_0..w_{n_in-1} ((3,3,Cout,Cin_s) or (Cout,9*Cin_s)) bf16;
             then scale (Cout,1) f32, bias (Cout,1) f32, mask (1,LB) f32, out (1,Cout,LB).
    Tap windows are static lane slices/concats of the prev/cur/next chunks."""

    def window(xp, xc, xn, off):
        if off == 0:
            return xc
        if off < 0:
            left = xp[:, lb + off:]
            if lb + off == 0:
                return left
            return jnp.concatenate([left, xc[:, :lb + off]], axis=1)
        right = xn[:, :off]
        if off == lb:
            return right
        return jnp.concatenate([xc[:, off:], right], axis=1)

    def kernel(*refs):
        x_refs = refs[:3 * n_in]
        w_refs = refs[3 * n_in:4 * n_in]
        scale_ref, bias_ref, mask_ref, o_ref = refs[4 * n_in:]
        cout = o_ref.shape[1]
        acc = jnp.zeros((cout, lb), jnp.float32)
        for s in range(n_in):
            xp = x_refs[3 * s][0]
            xc = x_refs[3 * s + 1][0]
            xn = x_refs[3 * s + 2][0]
            w_ref = w_refs[s]
            wins = []
            for g in range(3):                       # ky, dy = g - 1
                for h in range(3):                   # kx, dx = h - 1
                    off = (g - 1) * wpad + (h - 1)   # shift on the flat frame
                    win = window(xp, xc, xn, off)    # (Cin_s, LB)
                    if modes[s] == "fold":
                        wins.append(win)
                    else:
                        acc = acc + jnp.dot(w_ref[g, h], win,
                                            preferred_element_type=jnp.float32)
            if modes[s] == "fold":
                patch = jnp.concatenate(wins, axis=0)            # (9*Cin_s, LB)
                acc = acc + jnp.dot(w_ref[...], patch,
                                    preferred_element_type=jnp.float32)
        y = acc * scale_ref[...] + bias_ref[...]
        if apply_relu:
            y = jnp.maximum(y, 0.0)
        # Edge-clamped neighbor chunks / out-of-frame taps only affect frame-border
        # or lane-tail lanes; the mask zeroes them, which is also the zero-padding
        # invariant the next conv relies on.
        o_ref[0] = (y * mask_ref[...]).astype(o_ref.dtype)

    return kernel


def conv3x3(xs, ws, modes, scale, bias, mask, *, wpad, lb, apply_relu, out_dtype):
    """3x3 conv, stride 1, pad 1, no conv bias, + per-channel affine (+ optional ReLU).

    xs: tuple of (N, Cin_i, L) bf16 activations (channel concat fused by summing slabs).
    ws: matching weights, (3,3,Cout,Cin_i) ("tap" mode) or (Cout,9*Cin_i) ("fold").
    """
    n, _, lpad = xs[0].shape
    n_chunks = lpad // lb
    cout = int(scale.shape[0])
    kernel = _make_conv3x3_kernel(n_in=len(xs), modes=tuple(modes), wpad=wpad,
                                  lb=lb, apply_relu=apply_relu)

    in_specs, operands = [], []
    for xa in xs:
        cin = xa.shape[1]
        # prev / cur / next lane chunk of the same array (halo via three specs).
        in_specs += [
            pl.BlockSpec((1, cin, lb),
                         lambda i, lc: (i, 0, jnp.maximum(lc - 1, 0))),
            pl.BlockSpec((1, cin, lb), lambda i, lc: (i, 0, lc)),
            pl.BlockSpec((1, cin, lb),
                         lambda i, lc: (i, 0, jnp.minimum(lc + 1, n_chunks - 1))),
        ]
        operands += [xa, xa, xa]
    for wa in ws:
        in_specs.append(pl.BlockSpec(wa.shape,
                                     lambda i, lc, nd=wa.ndim: (0,) * nd))
        operands.append(wa)
    in_specs += [
        pl.BlockSpec((cout, 1), lambda i, lc: (0, 0)),
        pl.BlockSpec((cout, 1), lambda i, lc: (0, 0)),
        pl.BlockSpec((1, lb), lambda i, lc: (0, lc)),
    ]
    operands += [scale.reshape(cout, 1).astype(jnp.float32),
                 bias.reshape(cout, 1).astype(jnp.float32), mask]

    return pl.pallas_call(
        kernel,
        out_shape=jax.ShapeDtypeStruct((n, cout, lpad), out_dtype),
        grid=(n, n_chunks),
        in_specs=in_specs,
        out_specs=pl.BlockSpec((1, cout, lb), lambda i, lc: (i, 0, lc)),
        compiler_params=pltpu.CompilerParams(
            dimension_semantics=("parallel", "parallel"),
            vmem_limit_bytes=_vmem_limit()),
    )(*operands)


# ----------------------------------------------------------------------------
# Wrapper-side helpers (layout plumbing only)
# ----------------------------------------------------------------------------
def _pad_flatten(a, lpad):
    """(N, C, h, w) f32 -> (N, C, lpad) bf16 with a flattened zero frame border."""
    n, c, h, w = a.shape
    a = jnp.pad(a, ((0, 0), (0, 0), (1, 1), (1, 1)))
    a = a.reshape(n, c, (h + 2) * (w + 2))
    if lpad > a.shape[-1]:
        a = jnp.pad(a, ((0, 0), (0, 0), (0, lpad - a.shape[-1])))
    return a.astype(jnp.bfloat16)


def _border_mask(hpad, wpad, lpad):
    """(1, lpad) f32 mask: 1 inside the frame interior, 0 on border / lane tail."""
    m = jnp.zeros((hpad, wpad), jnp.float32).at[1:-1, 1:-1].set(1.0)
    m = m.reshape(1, hpad * wpad)
    if lpad > m.shape[-1]:
        m = jnp.pad(m, ((0, 0), (0, lpad - m.shape[-1])))
    return m


def _prep_w3x3_pertap(w_hwio):
    """(3, 3, Cin, Cout) -> (3, 3, Cout, Cin) bf16 (per-tap matmul slabs)."""
    return jnp.transpose(w_hwio, (0, 1, 3, 2)).astype(jnp.bfloat16)


def _prep_w3x3_fold(w_hwio):
    """(3, 3, Cin, Cout) -> (Cout, 9*Cin) bf16 (all 9 taps folded into K)."""
    kh, kw, cin, cout = w_hwio.shape
    w = jnp.transpose(w_hwio, (3, 0, 1, 2)).reshape(cout, kh * kw * cin)
    return w.astype(jnp.bfloat16)


def fold_bn(gamma, beta, mean, var):
    scale = gamma / jnp.sqrt(var + _EPS)
    bias = beta - mean * scale
    return scale, bias


# ----------------------------------------------------------------------------
# Decoder forward (all convs as Pallas kernels; resize is wrapper glue)
# ----------------------------------------------------------------------------
def decoder_forward(params, x_nchw, x_low_nchw, *, lane_block=2048):
    # x: (N, out_channels, H, W), x_low: (N, in_channels, Hl, Wl) -- PyTorch NCHW.
    n, ce, _, _ = x_nchw.shape
    nc = params["c3_w"].shape[-1]
    hl, wl = x_low_nchw.shape[2], x_low_nchw.shape[3]
    hpad, wpad = hl + 2, wl + 2
    lp = hpad * wpad
    # Lane block: multiple of 128, >= wpad+1 (halo fits in one neighbor chunk),
    # divides lpad exactly (no partial tail block).
    lb = max(_round_up(wpad + 1, 128), min(lane_block, _round_up(lp, 128)))
    lpad = _round_up(lp, lb)

    # TODO(synk): torch_utils.resize assumed bilinear (align_corners=False); plain JAX glue.
    x_up = jax.image.resize(x_nchw, (n, ce, hl, wl), method="bilinear")

    xuf = _pad_flatten(x_up, lpad)          # (N, Ce, L) bf16, zero frame border
    xlf = _pad_flatten(x_low_nchw, lpad)    # (N, Cin, L) bf16
    mask = _border_mask(hpad, wpad, lpad)   # (1, L) f32

    # low_block: ConvBlock(in_channels -> low_channels, 1x1)
    # TODO(synk): on v5e this memory-bound 1x1 conv could be fused into the first 3x3
    # kernel (compute `low` per lane chunk) to skip its HBM round trip.
    w_low = jnp.transpose(params["low_w"]).astype(jnp.bfloat16)    # (Cl, Cin)
    low = conv1x1_bn_relu(xlf, w_low, params["low_scale"], params["low_bias"],
                          mask, lb=lb)

    def prep(w_hwio):
        cin = w_hwio.shape[2]
        if cin <= _FOLD_CIN_MAX:
            return _prep_w3x3_fold(w_hwio), "fold"
        return _prep_w3x3_pertap(w_hwio), "tap"

    # classifier[0]: ConvBlock 3x3 on concat(x_up, low) -- concat fused into the kernel.
    w1x, m1x = prep(params["c1_w"][:, :, :ce, :])
    w1l, m1l = prep(params["c1_w"][:, :, ce:, :])
    h = conv3x3((xuf, low), (w1x, w1l), (m1x, m1l),
                params["c1_scale"], params["c1_bias"], mask,
                wpad=wpad, lb=lb, apply_relu=True, out_dtype=jnp.bfloat16)
    # TODO(synk): nn.Dropout(0.5)/nn.Dropout(0.1) are identity at inference; training-mode
    # masking not implemented.
    w2, m2 = prep(params["c2_w"])
    h = conv3x3((h,), (w2,), (m2,), params["c2_scale"], params["c2_bias"], mask,
                wpad=wpad, lb=lb, apply_relu=True, out_dtype=jnp.bfloat16)

    # Final 3x3 conv (no BN, no ReLU); pad num_classes up to a sublane multiple.
    ncp = _round_up(nc, 8)
    w3, m3 = prep(jnp.pad(params["c3_w"],
                          ((0, 0), (0, 0), (0, 0), (0, ncp - nc))))
    one = jnp.ones((ncp,), jnp.float32)
    zero = jnp.zeros((ncp,), jnp.float32)
    o = conv3x3((h,), (w3,), (m3,), one, zero, mask,
                wpad=wpad, lb=lb, apply_relu=False, out_dtype=jnp.float32)

    o = o[:, :nc, :lp].reshape(n, nc, hpad, wpad)
    return o[:, :, 1:-1, 1:-1]      # (N, num_classes, Hl, Wl), NCHW


# ----------------------------------------------------------------------------
# Pure-JAX reference (f32, precision="highest") for the correctness check
# ----------------------------------------------------------------------------
def _ref_conv(x_nchw, w_hwio, padding):
    return jax.lax.conv_general_dilated(
        x_nchw, w_hwio, window_strides=(1, 1), padding=padding,
        dimension_numbers=("NCHW", "HWIO", "NCHW"), precision="highest")


def decoder_forward_ref(params, x_nchw, x_low_nchw):
    n, ce, _, _ = x_nchw.shape
    hl, wl = x_low_nchw.shape[2], x_low_nchw.shape[3]

    cin, cl = params["low_w"].shape
    low = _ref_conv(x_low_nchw, params["low_w"].reshape(1, 1, cin, cl),
                    ((0, 0), (0, 0)))
    low = jnp.maximum(low * params["low_scale"][None, :, None, None]
                      + params["low_bias"][None, :, None, None], 0.0)

    x_up = jax.image.resize(x_nchw, (n, ce, hl, wl), method="bilinear")
    cat = jnp.concatenate([x_up, low], axis=1)

    pad = ((1, 1), (1, 1))
    h = _ref_conv(cat, params["c1_w"], pad)
    h = jnp.maximum(h * params["c1_scale"][None, :, None, None]
                    + params["c1_bias"][None, :, None, None], 0.0)
    h = _ref_conv(h, params["c2_w"], pad)
    h = jnp.maximum(h * params["c2_scale"][None, :, None, None]
                    + params["c2_bias"][None, :, None, None], 0.0)
    return _ref_conv(h, params["c3_w"], pad)


# ----------------------------------------------------------------------------
# Deterministic parameter init + driver
# ----------------------------------------------------------------------------
def _bn_params(key, c):
    k1, k2, k3, k4 = jax.random.split(key, 4)
    gamma = jax.random.uniform(k1, (c,), jnp.float32, 0.5, 1.5)
    beta = jax.random.normal(k2, (c,), jnp.float32) * 0.1
    mean = jax.random.normal(k3, (c,), jnp.float32) * 0.1
    var = jax.random.uniform(k4, (c,), jnp.float32, 0.5, 1.5)
    return fold_bn(gamma, beta, mean, var)


def make_params(key, in_channels, out_channels, num_classes, low_channels):
    ks = jax.random.split(key, 8)

    def w_init(k, shape, fan_in):
        return jax.random.normal(k, shape, jnp.float32) * (1.0 / jnp.sqrt(fan_in))

    params = {}
    # low_block: 1x1 conv in_channels -> low_channels (stored as (Cin, Cout))
    params["low_w"] = w_init(ks[0], (in_channels, low_channels), in_channels)
    params["low_scale"], params["low_bias"] = _bn_params(ks[1], low_channels)
    # classifier conv1: 3x3 (out+low) -> out, HWIO
    c_cat = out_channels + low_channels
    params["c1_w"] = w_init(ks[2], (3, 3, c_cat, out_channels), 9 * c_cat)
    params["c1_scale"], params["c1_bias"] = _bn_params(ks[3], out_channels)
    # classifier conv2: 3x3 out -> out
    params["c2_w"] = w_init(ks[4], (3, 3, out_channels, out_channels), 9 * out_channels)
    params["c2_scale"], params["c2_bias"] = _bn_params(ks[5], out_channels)
    # final conv: 3x3 out -> num_classes, no bias, no BN, no ReLU
    params["c3_w"] = w_init(ks[6], (3, 3, out_channels, num_classes), 9 * out_channels)
    return params


if __name__ == "__main__":
    key = jax.random.PRNGKey(0)
    k_param, k_x, k_low = jax.random.split(key, 3)

    # Small synthetic shapes consistent with the module's forward:
    #   x     : high-level features, (N, out_channels, H, W)
    #   x_low : low-level features,  (N, in_channels, Hl, Wl)  (finer resolution)
    # out_channels > 128 so the wide slabs take the per-tap MXU path while the
    # 48-channel low slab takes the 9-tap-folded path (both kernel paths exercised).
    N = 2
    in_channels = 8
    out_channels = 144
    num_classes = 6
    low_channels = 48
    H, W = 8, 8
    Hl, Wl = 16, 16

    params = make_params(k_param, in_channels, out_channels, num_classes, low_channels)
    x = jax.random.normal(k_x, (N, out_channels, H, W), jnp.float32)
    x_low = jax.random.normal(k_low, (N, in_channels, Hl, Wl), jnp.float32)

    # lane_block=128 keeps several lane chunks even at this tiny spatial size so the
    # multi-chunk halo path (prev/cur/next blocks, edge clamping) is exercised;
    # production sizes would use the default 2048.
    out = jax.block_until_ready(decoder_forward(params, x, x_low, lane_block=128))
    assert out.shape == (N, num_classes, Hl, Wl), out.shape

    ref = jax.block_until_ready(decoder_forward_ref(params, x, x_low))
    # bf16 MXU operands + bf16 intermediate activations vs f32 "highest" reference.
    max_err = float(jnp.max(jnp.abs(out - ref)))
    assert jnp.allclose(out, ref, atol=1e-1, rtol=1e-1), max_err

    print("KERNEL_OK")
</pallas_src>

<mosaic_0001>
module attributes {stable_mosaic.version = 11 : i64} {
  func.func @_conv1x1_kernel(%arg0: i32, %arg1: i32, %arg2: memref<1x8x128xbf16, #tpu.memory_space<vmem>>, %arg3: memref<48x8xbf16, #tpu.memory_space<vmem>>, %arg4: memref<48x1xf32, #tpu.memory_space<vmem>>, %arg5: memref<48x1xf32, #tpu.memory_space<vmem>>, %arg6: memref<1x128xf32, #tpu.memory_space<vmem>>, %arg7: memref<1x48x128xbf16, #tpu.memory_space<vmem>>) attributes {dimension_semantics = [#tpu.dimension_semantics<parallel>, #tpu.dimension_semantics<parallel>], iteration_bounds = array<i64: 2, 3>, scalar_prefetch = 0 : i64, scratch_operands = 0 : i64, tpu.core_type = #tpu.core_type<tc>, window_params = [{transform_indices = @transform_0, window_bounds = array<i64: 1, 8, 128>}, {pipeline_mode = #tpu.pipeline_mode<synchronous>, transform_indices = @transform_1, window_bounds = array<i64: 48, 8>}, {pipeline_mode = #tpu.pipeline_mode<synchronous>, transform_indices = @transform_2, window_bounds = array<i64: 48, 1>}, {pipeline_mode = #tpu.pipeline_mode<synchronous>, transform_indices = @transform_3, window_bounds = array<i64: 48, 1>}, {transform_indices = @transform_4, window_bounds = array<i64: 1, 128>}, {transform_indices = @transform_5, window_bounds = array<i64: 1, 48, 128>}]} {
    %c0 = arith.constant 0 : index
    %c0_0 = arith.constant 0 : index
    %0 = vector.load %arg3[%c0, %c0_0] : memref<48x8xbf16, #tpu.memory_space<vmem>>, vector<48x8xbf16>
    %c0_1 = arith.constant 0 : index
    %c0_2 = arith.constant 0 : index
    %c0_3 = arith.constant 0 : index
    %1 = vector.load %arg2[%c0_1, %c0_2, %c0_3] : memref<1x8x128xbf16, #tpu.memory_space<vmem>>, vector<1x8x128xbf16>
    %2 = vector.shape_cast %1 : vector<1x8x128xbf16> to vector<8x128xbf16>
    %cst = arith.constant dense<0.000000e+00> : vector<48x128xf32>
    %3 = tpu.matmul %0, %2, %cst {dimension_numbers = #tpu.dot_dimension_numbers<[1], [0], [0], [1], [0, 0, 1, 1], [], []>} : vector<48x8xbf16>, vector<8x128xbf16>, vector<48x128xf32> -> vector<48x128xf32>
    %c0_4 = arith.constant 0 : index
    %c0_5 = arith.constant 0 : index
    %4 = vector.load %arg4[%c0_4, %c0_5] : memref<48x1xf32, #tpu.memory_space<vmem>>, vector<48x1xf32>
    %5 = vector.broadcast %4 : vector<48x1xf32> to vector<48x128xf32>
    %6 = arith.mulf %3, %5 : vector<48x128xf32>
    %c0_6 = arith.constant 0 : index
    %c0_7 = arith.constant 0 : index
    %7 = vector.load %arg5[%c0_6, %c0_7] : memref<48x1xf32, #tpu.memory_space<vmem>>, vector<48x1xf32>
    %8 = vector.broadcast %7 : vector<48x1xf32> to vector<48x128xf32>
    %9 = arith.addf %6, %8 : vector<48x128xf32>
    %cst_8 = arith.constant 0.000000e+00 : f32
    %10 = vector.broadcast %cst_8 : f32 to vector<48x128xf32>
    %11 = arith.maximumf %9, %10 : vector<48x128xf32>
    %c0_9 = arith.constant 0 : index
    %c0_10 = arith.constant 0 : index
    %12 = vector.load %arg6[%c0_9, %c0_10] : memref<1x128xf32, #tpu.memory_space<vmem>>, vector<1x128xf32>
    %13 = vector.broadcast %12 : vector<1x128xf32> to vector<48x128xf32>
    %14 = arith.mulf %11, %13 : vector<48x128xf32>
    %15 = arith.truncf %14 : vector<48x128xf32> to vector<48x128xbf16>
    %c0_11 = arith.constant 0 : index
    %c0_12 = arith.constant 0 : index
    %c0_13 = arith.constant 0 : index
    %16 = vector.load %arg7[%c0_11, %c0_12, %c0_13] : memref<1x48x128xbf16, #tpu.memory_space<vmem>>, vector<1x48x128xbf16>
    %17 = vector.shape_cast %16 : vector<1x48x128xbf16> to vector<48x128xbf16>
    %18 = vector.shape_cast %15 : vector<48x128xbf16> to vector<1x48x128xbf16>
    tpu.vector_store %arg7[%c0_11, %c0_12, %c0_13], %18 {strides = array<i32>} : memref<1x48x128xbf16, #tpu.memory_space<vmem>>, vector<1x48x128xbf16>,
    return
  }
  func.func @transform_0(%arg0: i32, %arg1: i32) -> (i32, i32, i32) {
    %c0_i32 = arith.constant 0 : i32
    %c0_i32_0 = arith.constant 0 : i32
    return %arg0, %c0_i32, %arg1 : i32, i32, i32
  }
  func.func @transform_1(%arg0: i32, %arg1: i32) -> (i32, i32) {
    %c0_i32 = arith.constant 0 : i32
    %c0_i32_0 = arith.constant 0 : i32
    %c0_i32_1 = arith.constant 0 : i32
    return %c0_i32, %c0_i32_0 : i32, i32
  }
  func.func @transform_2(%arg0: i32, %arg1: i32) -> (i32, i32) {
    %c0_i32 = arith.constant 0 : i32
    %c0_i32_0 = arith.constant 0 : i32
    %c0_i32_1 = arith.constant 0 : i32
    return %c0_i32, %c0_i32_0 : i32, i32
  }
  func.func @transform_3(%arg0: i32, %arg1: i32) -> (i32, i32) {
    %c0_i32 = arith.constant 0 : i32
    %c0_i32_0 = arith.constant 0 : i32
    %c0_i32_1 = arith.constant 0 : i32
    return %c0_i32, %c0_i32_0 : i32, i32
  }
  func.func @transform_4(%arg0: i32, %arg1: i32) -> (i32, i32) {
    %c0_i32 = arith.constant 0 : i32
    %c0_i32_0 = arith.constant 0 : i32
    return %c0_i32, %arg1 : i32, i32
  }
  func.func @transform_5(%arg0: i32, %arg1: i32) -> (i32, i32, i32) {
    %c0_i32 = arith.constant 0 : i32
    %c0_i32_0 = arith.constant 0 : i32
    return %arg0, %c0_i32, %arg1 : i32, i32, i32
  }
}

</mosaic_0001>

<llo_original>
// kernel: tpu_custom_call.1
$region0: #{tpu_custom_call.1}
  #allocation0 [shape = 'u32[]', space=smem, size = 0x4, offset = 0x4, fixed_abs, tag = 'smem constant byte address 0x4 - core index']
  #allocation1 [shape = 'u32[72,128]{1,0:T(1,128)}', space=vmem, size = 0x9000, scoped, tag = 'internal scratch']
  %s0 = inlined_call_operand.vmem [shape: bf16[2,8,384], index: 0, kind: input, shape index: {}]
  %s1 = inlined_call_operand.vmem [shape: bf16[48,8], index: 1, kind: input, shape index: {}]
  %s2 = inlined_call_operand.vmem [shape: f32[48,1], index: 2, kind: input, shape index: {}]
  %s3 = inlined_call_operand.vmem [shape: f32[48,1], index: 3, kind: input, shape index: {}]
  %s4 = inlined_call_operand.vmem [shape: f32[1,384], index: 4, kind: input, shape index: {}]
  %s5 = inlined_call_operand.hbm [shape: bf16[2,48,384], index: 5, kind: output, shape index: {}]
  %s6 = sld [smem:[#allocation0]]
  $region53: #{tpu_custom_call.1} parent=0
    _
  %s8 = ssub.s32 1, %s6
  %s9 = scalar_select 0, %s8, %s6
  $region1: #{tpu_custom_call.1} parent=0
    #allocation2 [shape = 'u8[24576]{0}', space=vmem, size = 0x6000, scoped, tag = 'output window, operand 0']
    #allocation3 [shape = 's32[2]{0}', space=sflag, size = 0x8, scoped, tag = 'scoped memory for tpu_custom_call.1']
    %10 = vsyncpa [#allocation3], 0
    %s11 = scalar_lea.sflag [#allocation3], 1
    %12 = vsyncpa %s11, 0
    loop: start=0, step=1, limit=8
    $region2: #{tpu_custom_call.1} parent=1 // loop_pre_header
      _
    $region3: #{tpu_custom_call.1} parent=1 // loop_header
      %s14 = sphi 0, %s18
      %p15 = scmp.ge.s32.totalorder %s14, 8
      %s21 = sphi 0, %s33
      %s22 = sphi 0, %s29
      %s23 = sphi 0, %s21
      %s24 = sphi 0, %s22
      %s25 = sphi 0, %s23
      %s26 = sphi 0, %s24
      %s38 = sphi 0, %s40
      %s41 = sphi 0, %s38
      %s42 = sphi 0, %s41
      %s58 = sphi 0, %s42
      %s62 = sphi 0, %s62
      %s64 = sphi 0, %s62
      %s65 = sphi 0, %s64
      %s79 = sphi 0, %s65
      %s83 = sphi 0, %s83
      %s85 = sphi 0, %s83
      %s86 = sphi 0, %s85
      %s100 = sphi 0, %s86
      %s104 = sphi 0, %s104
      %s106 = sphi 0, %s104
      %s107 = sphi 0, %s106
      %s121 = sphi 0, %s107
      %s127 = sphi 0, %s129
      %s130 = sphi 0, %s127
      %s131 = sphi 0, %s130
      %s147 = sphi 0, %s131
      %s155 = sphi 0, %s157
      %s158 = sphi 0, %s155
      %s159 = sphi 0, %s158
      %s175 = sphi 0, %s159
    $region4: #{tpu_custom_call.1} parent=1 // loop_header_branch
      %17 = sbr.rel (%p15) target = $region8
    $region5: #{tpu_custom_call.1} parent=1 // loop_body
      %s19 = ssub.s32 %s14, 1
      %s20 = ssub.s32 %s14, 2
      %s27 = sadd.s32 1, %s22
      %p28 = scmp.ge.s32.totalorder %s27, 3
      %s29 = scalar_select %p28, 0, %s27
      %s30 = sadd.s32 1, %s21
      %s31 = scalar_select %p28, %s30, %s21
      %p32 = scmp.ge.s32.totalorder %s31, 2
      %s33 = scalar_select %p32, 0, %s31
      %s34 = ssub.s32 %s21, %s33
      %s35 = ssub.s32 %s22, %s29
      %s36 = sor.u32 %s34, %s35
      %p37 = scmp.eq.s32.totalorder %s36, 0
      %s39 = sadd.s32 %s38, 1
      %s40 = scalar_select %p37, %s38, %s39
      %p43 = pneg %p37
      %p44 = scmp.eq.s32.totalorder %s14, 5
      %p45 = por %p43, %p44
      %p46 = scmp.ne.s32.totalorder %s38, %s41
      %p47 = scmp.eq.s32.totalorder %s14, 0
      %p48 = por %p46, %p47
      %p49 = scmp.ne.s32.totalorder %s38, %s41
      %p50 = scmp.eq.s32.totalorder %s19, 5
      %p51 = por %p49, %p50
      %p52 = scmp.ne.s32.totalorder %s41, %s42
      %p53 = scmp.eq.s32.totalorder %s19, 0
      %p54 = por %p52, %p53
      %p55 = scmp.ne.s32.totalorder %s41, %s42
      %p56 = scmp.eq.s32.totalorder %s20, 5
      %p57 = por %p55, %p56
      %p59 = scmp.ne.s32.totalorder %s42, %s58
      %p60 = scmp.eq.s32.totalorder %s20, 0
      %p61 = por %p59, %p60
      %s63 = sadd.s32 %s62, 1
      %p66 = scmp.eq.s32.totalorder %s14, 5
      %p67 = scmp.ne.s32.totalorder %s62, %s64
      %p68 = scmp.eq.s32.totalorder %s14, 0
      %p69 = por %p67, %p68
      %p70 = scmp.ne.s32.totalorder %s62, %s64
      %p71 = scmp.eq.s32.totalorder %s19, 5
      %p72 = por %p70, %p71
      %p73 = scmp.ne.s32.totalorder %s64, %s65
      %p74 = scmp.eq.s32.totalorder %s19, 0
      %p75 = por %p73, %p74
      %p76 = scmp.ne.s32.totalorder %s64, %s65
      %p77 = scmp.eq.s32.totalorder %s20, 5
      %p78 = por %p76, %p77
      %p80 = scmp.ne.s32.totalorder %s65, %s79
      %p81 = scmp.eq.s32.totalorder %s20, 0
      %p82 = por %p80, %p81
      %s84 = sadd.s32 %s83, 1
      %p87 = scmp.eq.s32.totalorder %s14, 5
      %p88 = scmp.ne.s32.totalorder %s83, %s85
      %p89 = scmp.eq.s32.totalorder %s14, 0
      %p90 = por %p88, %p89
      %p91 = scmp.ne.s32.totalorder %s83, %s85
      %p92 = scmp.eq.s32.totalorder %s19, 5
      %p93 = por %p91, %p92
      %p94 = scmp.ne.s32.totalorder %s85, %s86
      %p95 = scmp.eq.s32.totalorder %s19, 0
      %p96 = por %p94, %p95
      %p97 = scmp.ne.s32.totalorder %s85, %s86
      %p98 = scmp.eq.s32.totalorder %s20, 5
      %p99 = por %p97, %p98
      %p101 = scmp.ne.s32.totalorder %s86, %s100
      %p102 = scmp.eq.s32.totalorder %s20, 0
      %p103 = por %p101, %p102
      %s105 = sadd.s32 %s104, 1
      %p108 = scmp.eq.s32.totalorder %s14, 5
      %p109 = scmp.ne.s32.totalorder %s104, %s106
      %p110 = scmp.eq.s32.totalorder %s14, 0
      %p111 = por %p109, %p110
      %p112 = scmp.ne.s32.totalorder %s104, %s106
      %p113 = scmp.eq.s32.totalorder %s19, 5
      %p114 = por %p112, %p113
      %p115 = scmp.ne.s32.totalorder %s106, %s107
      %p116 = scmp.eq.s32.totalorder %s19, 0
      %p117 = por %p115, %p116
      %p118 = scmp.ne.s32.totalorder %s106, %s107
      %p119 = scmp.eq.s32.totalorder %s20, 5
      %p120 = por %p118, %p119
      %p122 = scmp.ne.s32.totalorder %s107, %s121
      %p123 = scmp.eq.s32.totalorder %s20, 0
      %p124 = por %p122, %p123
      %s125 = ssub.s32 %s22, %s29
      %p126 = scmp.eq.s32.totalorder %s125, 0
      %s128 = sadd.s32 %s127, 1
      %s129 = scalar_select %p126, %s127, %s128
      %p132 = pneg %p126
      %p133 = scmp.eq.s32.totalorder %s14, 5
      %p134 = por %p132, %p133
      %p135 = scmp.ne.s32.totalorder %s127, %s130
      %p136 = scmp.eq.s32.totalorder %s14, 0
      %p137 = por %p135, %p136
      %p138 = scmp.ne.s32.totalorder %s127, %s130
      %p139 = scmp.eq.s32.totalorder %s19, 5
      %p140 = por %p138, %p139
      %p141 = scmp.ne.s32.totalorder %s130, %s131
      %p142 = scmp.eq.s32.totalorder %s19, 0
      %p143 = por %p141, %p142
      %p144 = scmp.ne.s32.totalorder %s130, %s131
      %p145 = scmp.eq.s32.totalorder %s20, 5
      %p146 = por %p144, %p145
      %p148 = scmp.ne.s32.totalorder %s131, %s147
      %p149 = scmp.eq.s32.totalorder %s20, 0
      %p150 = por %p148, %p149
      %s151 = ssub.s32 %s21, %s33
      %s152 = ssub.s32 %s22, %s29
      %s153 = sor.u32 %s151, %s152
      %p154 = scmp.eq.s32.totalorder %s153, 0
      %s156 = sadd.s32 %s155, 1
      %s157 = scalar_select %p154, %s155, %s156
      %p160 = pneg %p154
      %p161 = scmp.eq.s32.totalorder %s14, 5
      %p162 = por %p160, %p161
      %p163 = scmp.ne.s32.totalorder %s155, %s158
      %p164 = scmp.eq.s32.totalorder %s14, 0
      %p165 = por %p163, %p164
      %p166 = scmp.ne.s32.totalorder %s155, %s158
      %p167 = scmp.eq.s32.totalorder %s19, 5
      %p168 = por %p166, %p167
      %p169 = scmp.ne.s32.totalorder %s158, %s159
      %p170 = scmp.eq.s32.totalorder %s19, 0
      %p171 = por %p169, %p170
      %p172 = scmp.ne.s32.totalorder %s158, %s159
      %p173 = scmp.eq.s32.totalorder %s20, 5
      %p174 = por %p172, %p173
      %p176 = scmp.ne.s32.totalorder %s159, %s175
      %p177 = scmp.eq.s32.totalorder %s20, 0
      %p178 = por %p176, %p177
      %p179 = scmp.le.s32.totalorder 1, %s14
      %p180 = scmp.lt.s32.totalorder %s14, 7
      %p181 = pnand %p179, %p180
      %p182 = pneg %p181
      // Predicated region
      $region9: #{tpu_custom_call.1} parent=5 // pred_check
        _
      $region10: #{tpu_custom_call.1} parent=5 // pred_check_branch
        %184 = sbr.rel (%p181) target = $region12
      $region11: #{tpu_custom_call.1} parent=5 // pred_region
        %s185 = ssub.s32 %s14, 1
        // Predicated region
        $region13: #{tpu_custom_call.1} parent=11 // pred_check
          %p186 = pneg %p75
        $region14: #{tpu_custom_call.1} parent=11 // pred_check_branch
          %188 = sbr.rel (%p186) target = $region16
        $region15: #{tpu_custom_call.1} parent=11 // pred_region
          _
        $region16: #{tpu_custom_call.1} parent=11 // pred_fallthru
          _
        // Predicated region
        $region17: #{tpu_custom_call.1} parent=11 // pred_check
          %p189 = pneg %p96
        $region18: #{tpu_custom_call.1} parent=11 // pred_check_branch
          %191 = sbr.rel (%p189) target = $region20
        $region19: #{tpu_custom_call.1} parent=11 // pred_region
          _
        $region20: #{tpu_custom_call.1} parent=11 // pred_fallthru
          _
        // Predicated region
        $region21: #{tpu_custom_call.1} parent=11 // pred_check
          %p192 = pneg %p117
        $region22: #{tpu_custom_call.1} parent=11 // pred_check_branch
          %194 = sbr.rel (%p192) target = $region24
        $region23: #{tpu_custom_call.1} parent=11 // pred_region
          _
        $region24: #{tpu_custom_call.1} parent=11 // pred_fallthru
          _
      $region12: #{tpu_custom_call.1} parent=5 // pred_fallthru
        _
      %p195 = scmp.lt.s32.totalorder %s14, 6
      // Predicated region
      $region25: #{tpu_custom_call.1} parent=5 // pred_check
        %p196 = pneg %p195
      $region26: #{tpu_custom_call.1} parent=5 // pred_check_branch
        %198 = sbr.rel (%p196) target = $region28
      $region27: #{tpu_custom_call.1} parent=5 // pred_region
        // Predicated region
        $region29: #{tpu_custom_call.1} parent=27 // pred_check
          %p199 = pneg %p48
        $region30: #{tpu_custom_call.1} parent=27 // pred_check_branch
          %201 = sbr.rel (%p199) target = $region32
        $region31: #{tpu_custom_call.1} parent=27 // pred_region
          %p202 = scmp.lt.s32.totalorder %s21, 1
          %s203 = scalar_select %p202, %s21, 1
          %p204 = scmp.lt.s32.totalorder %s22, 2
          %s205 = scalar_select %p204, %s22, 2
          %s206 = smul.addr %s203, 3
          %s207 = sadd.s32 %s205, %s206
          %s208 = smul.addr %s207, 4
          %s209 = scalar_lea.vmem %s0, %s208
        $region32: #{tpu_custom_call.1} parent=27 // pred_fallthru
          _
        // Predicated region
        $region33: #{tpu_custom_call.1} parent=27 // pred_check
          %p210 = pneg %p137
        $region34: #{tpu_custom_call.1} parent=27 // pred_check_branch
          %212 = sbr.rel (%p210) target = $region36
        $region35: #{tpu_custom_call.1} parent=27 // pred_region
          %p213 = scmp.lt.s32.totalorder %s22, 2
          %s214 = scalar_select %p213, %s22, 2
          %s215 = scalar_lea.vmem %s4, %s214
        $region36: #{tpu_custom_call.1} parent=27 // pred_fallthru
          _
      $region28: #{tpu_custom_call.1} parent=5 // pred_fallthru
        _
      %p216 = scmp.le.s32.totalorder 1, %s14
      %p217 = scmp.lt.s32.totalorder %s14, 7
      %p218 = pnand %p216, %p217
      %p219 = pneg %p218
      // Predicated region
      $region37: #{tpu_custom_call.1} parent=5 // pred_check
        _
      $region38: #{tpu_custom_call.1} parent=5 // pred_check_branch
        %221 = sbr.rel (%p218) target = $region40
      $region39: #{tpu_custom_call.1} parent=5 // pred_region
        %s222 = ssub.s32 %s14, 1
        %p223 = scmp.lt.s32.totalorder %s23, 1
        %s224 = scalar_select %p223, %s23, 1
        %p225 = scmp.lt.s32.totalorder %s24, 2
        %s226 = scalar_select %p225, %s24, 2
        %s227 = smul.addr %s224, 3
        %s228 = sadd.s32 %s226, %s227
        %s229 = smul.addr %s228, 4
        %s230 = scalar_lea.vmem %s0, %s229
        %p231 = pneg %p54
        %p232 = pneg %p51
        %p233 = pneg %p75
        %p234 = pneg %p72
        %p235 = pneg %p96
        %p236 = pneg %p93
        %p237 = pneg %p117
        %p238 = pneg %p114
        %p239 = scmp.lt.s32.totalorder %s24, 2
        %s240 = scalar_select %p239, %s24, 2
        %s241 = scalar_lea.vmem %s4, %s240
        %p242 = pneg %p143
        %p243 = pneg %p140
        %p244 = pneg %p171
        %p245 = pneg %p168
        %s246 = sand.u32 %s158, 1
        %s247 = scalar_lea.sflag [#allocation3], %s246
        %s248 = sand.u32 %s158, 1
        %s249 = smul.addr %s248, 24
        %s250 = scalar_lea.vmem [#allocation2], %s249
        %p251 = scmp.lt.s32.totalorder %s23, 1
        %s252 = scalar_select %p251, %s23, 1
        %p253 = scmp.lt.s32.totalorder %s24, 2
        %s254 = scalar_select %p253, %s24, 2
        %s255 = smul.addr %s252, 3
        %s256 = sadd.s32 %s254, %s255
        %s257 = smul.addr %s256, 4
        %s258 = scalar_lea.vmem %s0, %s257
        %p259 = scmp.lt.s32.totalorder %s24, 2
        %s260 = scalar_select %p259, %s24, 2
        %s261 = scalar_lea.vmem %s4, %s260
        %v263 = vld [vmem:[%s1] sm:$0xf]
        %v264 = vld [vmem:[%s1 + $0x4] sm:$0xf]
        %v265 = vld [vmem:[%s1 + $0x8] sm:$0xf]
        %v266 = vld [vmem:[%s1 + $0xc] sm:$0xf]
        %v267 = vld [vmem:[%s1 + $0x10] sm:$0xf]
        %v268 = vld [vmem:[%s1 + $0x14] sm:$0xf]
        %v269 = vld [vmem:[%s258] sm:$0xf]
        %v276 = vunpack.c.l.b16 %v263
        %v277 = vunpack.c.l.b16 %v264
        %v278 = vunpack.c.l.b16 %v265
        %v279 = vunpack.c.l.b16 %v266
        %v280 = vunpack.c.l.b16 %v267
        %v281 = vunpack.c.l.b16 %v268
        %v282 = vpack.c.b16 %v277, %v276
        %v283 = vpack.c.b16 %v279, %v278
        %v284 = vpack.c.b16 %v281, %v280
        %vm285 = vcmask 64512
        %v287 = vsel %vm285, %v282, 0
        %v290 = vsel %vm285, %v283, 0
        %v293 = vsel %vm285, %v284, 0
        %vm295 = vcmask 1043456
        %v297 = vsel %vm295, %v269, 0
        %299 = vmatpush.bf16.msra.mxu0 0
        %300 = vmatpush.bf16.msra.mxu0 0
        %301 = vmatpush.bf16.msra.mxu0 0
        %302 = vmatpush.bf16.msra.mxu0 0
        %303 = vmatpush.bf16.msra.mxu0 0
        %304 = vmatpush.bf16.msra.mxu0 0
        %305 = vmatpush.bf16.msra.mxu0 0
        %306 = vmatpush.bf16.msra.mxu0 %v297
        %307 = vmatmul.bf16.gmra.mxu0 %v287
        %v308 = vpop.f32.mrf.mxu0
        %v309 = vadd.f32 0.0, %v308
        %v310 = vpop.f32.mrf.mxu0
        %v311 = vadd.f32 0.0, %v310
        %312 = vmatmul.bf16.gmra.mxu0 %v290
        %v313 = vpop.f32.mrf.mxu0
        %v314 = vadd.f32 0.0, %v313
        %v315 = vpop.f32.mrf.mxu0
        %v316 = vadd.f32 0.0, %v315
        %317 = vmatmul.bf16.gmra.mxu0 %v293
        %v318 = vpop.f32.mrf.mxu0
        %v319 = vadd.f32 0.0, %v318
        %v320 = vpop.f32.mrf.mxu0
        %v321 = vadd.f32 0.0, %v320
        %322 = vdwg.mxu0
        %v323 = vld [vmem:[%s2] sm:$0xff]
        %v324 = vld [vmem:[%s2 + $0x8] sm:$0xff]
        %v325 = vld [vmem:[%s2 + $0x10] sm:$0xff]
        %v326 = vld [vmem:[%s2 + $0x18] sm:$0xff]
        %v327 = vld [vmem:[%s2 + $0x20] sm:$0xff]
        %v328 = vld [vmem:[%s2 + $0x28] sm:$0xff]
        %330 = vset.pattern.permute.xlu0 0
        %331 = vperm.xlu0 %330, %v323
        %v332 = vpop.permute.xlu0 %331
        %335 = vset.pattern.permute.xlu0 0
        %336 = vperm.xlu0 %335, %v324
        %v337 = vpop.permute.xlu0 %336
        %340 = vset.pattern.permute.xlu0 0
        %341 = vperm.xlu0 %340, %v325
        %v342 = vpop.permute.xlu0 %341
        %345 = vset.pattern.permute.xlu0 0
        %346 = vperm.xlu0 %345, %v326
        %v347 = vpop.permute.xlu0 %346
        %350 = vset.pattern.permute.xlu0 0
        %351 = vperm.xlu0 %350, %v327
        %v352 = vpop.permute.xlu0 %351
        %355 = vset.pattern.permute.xlu0 0
        %356 = vperm.xlu0 %355, %v328
        %v357 = vpop.permute.xlu0 %356
        %v359 = vmul.f32 %v309, %v332
        %v360 = vmul.f32 %v311, %v337
        %v361 = vmul.f32 %v314, %v342
        %v362 = vmul.f32 %v316, %v347
        %v363 = vmul.f32 %v319, %v352
        %v364 = vmul.f32 %v321, %v357
        %v365 = vld [vmem:[%s3] sm:$0xff]
        %v366 = vld [vmem:[%s3 + $0x8] sm:$0xff]
        %v367 = vld [vmem:[%s3 + $0x10] sm:$0xff]
        %v368 = vld [vmem:[%s3 + $0x18] sm:$0xff]
        %v369 = vld [vmem:[%s3 + $0x20] sm:$0xff]
        %v370 = vld [vmem:[%s3 + $0x28] sm:$0xff]
        %372 = vset.pattern.permute.xlu0 0
        %373 = vperm.xlu0 %372, %v365
        %v374 = vpop.permute.xlu0 %373
        %377 = vset.pattern.permute.xlu0 0
        %378 = vperm.xlu0 %377, %v366
        %v379 = vpop.permute.xlu0 %378
        %382 = vset.pattern.permute.xlu0 0
        %383 = vperm.xlu0 %382, %v367
        %v384 = vpop.permute.xlu0 %383
        %387 = vset.pattern.permute.xlu0 0
        %388 = vperm.xlu0 %387, %v368
        %v389 = vpop.permute.xlu0 %388
        %392 = vset.pattern.permute.xlu0 0
        %393 = vperm.xlu0 %392, %v369
        %v394 = vpop.permute.xlu0 %393
        %397 = vset.pattern.permute.xlu0 0
        %398 = vperm.xlu0 %397, %v370
        %v399 = vpop.permute.xlu0 %398
        %v401 = vadd.f32 %v359, %v374
        %v402 = vadd.f32 %v360, %v379
        %v403 = vadd.f32 %v361, %v384
        %v404 = vadd.f32 %v362, %v389
        %v405 = vadd.f32 %v363, %v394
        %v406 = vadd.f32 %v364, %v399
        %v407 = vmax.f32 %v401, 0.0
        %v408 = vmax.f32 %v402, 0.0
        %v409 = vmax.f32 %v403, 0.0
        %v410 = vmax.f32 %v404, 0.0
        %v411 = vmax.f32 %v405, 0.0
        %v412 = vmax.f32 %v406, 0.0
        %v413 = vld [vmem:[%s261] sm:$0x1]
        %v415 = vperm.slane %v413, 0
        %v417 = vmul.f32 %v407, %v415
        %v418 = vmul.f32 %v408, %v415
        %v419 = vmul.f32 %v409, %v415
        %v420 = vmul.f32 %v410, %v415
        %v421 = vmul.f32 %v411, %v415
        %v422 = vmul.f32 %v412, %v415
        %v423 = vpack.c.bf16 %v417, %v417
        %v424 = vpack.c.bf16 %v418, %v418
        %v425 = vpack.c.bf16 %v419, %v419
        %v426 = vpack.c.bf16 %v420, %v420
        %v427 = vpack.c.bf16 %v421, %v421
        %v428 = vpack.c.bf16 %v422, %v422
        %429 = vst [vmem:[%s250] sm:$0xf] %v423
        %430 = vst [vmem:[%s250 + $0x4] sm:$0xf] %v424
        %431 = vst [vmem:[%s250 + $0x8] sm:$0xf] %v425
        %432 = vst [vmem:[%s250 + $0xc] sm:$0xf] %v426
        %433 = vst [vmem:[%s250 + $0x10] sm:$0xf] %v427
        %434 = vst [vmem:[%s250 + $0x14] sm:$0xf] %v428
        %s435 = sand.u32 %s158, 1
        %s436 = scalar_lea.sflag [#allocation3], %s435
        %s437 = sand.u32 %s158, 1
        %s438 = smul.addr %s437, 24
        %s439 = scalar_lea.vmem [#allocation2], %s438
        // Predicated region
        $region41: #{tpu_custom_call.1} parent=39 // pred_check
          %p440 = pneg %p168
        $region42: #{tpu_custom_call.1} parent=39 // pred_check_branch
          %442 = sbr.rel (%p440) target = $region44
        $region43: #{tpu_custom_call.1} parent=39 // pred_region
          %444 = vsyncadd %s436, 0
          %s445 = smul.addr %s23, 18
          %s446 = sadd.s32 %s24, %s445
          %s447 = smul.addr %s446, 4
          %s448 = scalar_lea.hbm %s5, %s447
          %s449 = sshll.u32 %s439, 4
          %s450 = int_to_ptr.vmem [resolvable:$true] %s449
          %s451 = sshll.u32 %s448, 4
          %s452 = int_to_ptr.hbm [resolvable:$true] %s451
          %457 = dma.vmem_to_hbm [thread:$0]  %s450, 384, %s452, %s436, 64, 192, 4
        $region44: #{tpu_custom_call.1} parent=39 // pred_fallthru
          _
      $region40: #{tpu_custom_call.1} parent=5 // pred_fallthru
        _
      %p458 = scmp.le.s32.totalorder 2, %s14
      // Predicated region
      $region45: #{tpu_custom_call.1} parent=5 // pred_check
        %p459 = pneg %p458
      $region46: #{tpu_custom_call.1} parent=5 // pred_check_branch
        %461 = sbr.rel (%p459) target = $region48
      $region47: #{tpu_custom_call.1} parent=5 // pred_region
        %s462 = ssub.s32 %s14, 2
        // Predicated region
        $region49: #{tpu_custom_call.1} parent=47 // pred_check
          %p463 = pneg %p174
        $region50: #{tpu_custom_call.1} parent=47 // pred_check_branch
          %465 = sbr.rel (%p463) target = $region52
        $region51: #{tpu_custom_call.1} parent=47 // pred_region
          %s466 = sand.u32 %s159, 1
          %s467 = scalar_lea.sflag [#allocation3], %s466
          %s468 = sand.u32 %s159, 1
          %s469 = smul.addr %s468, 24
          %s470 = scalar_lea.vmem [#allocation2], %s469
          %472 = dma.done %s467, 384
        $region52: #{tpu_custom_call.1} parent=47 // pred_fallthru
          _
      $region48: #{tpu_custom_call.1} parent=5 // pred_fallthru
        _
    $region6: #{tpu_custom_call.1} parent=1 // loop_footer
      %s18 = sadd.s32 1, %s14
    $region7: #{tpu_custom_call.1} parent=1 // loop_footer_branch
      %13 = sbr.rel target = $region3
    $region8: #{tpu_custom_call.1} parent=1 // loop_exit
      _
    %473 = vsyncpa [#allocation3], 1
    %s474 = scalar_lea.sflag [#allocation3], 1
    %475 = vsyncpa %s474, 1

</llo_original>
